<compile_context>
chip_gen: v7x
topology: tpu7x:2x2x1
jax: 0.10.0
libtpu: 0.0.40
codegen_flags: <defaults>
</compile_context>

<pallas_src>
import functools
import math

import numpy as np
import jax
import jax.numpy as jnp
from jax.experimental import pallas as pl
from jax.experimental.pallas import tpu as pltpu


# ------------------------- fused front-end kernel ---------------------------
# input_projection (Linear) + Conv1d(k=3,s=2)+ReLU + Conv1d(k=3,s=2)+ReLU,
# all intermediates kept in VMEM scratch (no HBM round trips between stages).

def _frontend_kernel(x_ref, pw_ref, pb_ref, w1_ref, b1_ref, w2_ref, b2_ref,
                     o_ref, h0_ref, h1_ref):
    # x: (1, T, d_model); pw: (d_model, d_out); w1/w2: (3, Cin, Cout); b*: (1, Cout)
    L1 = h1_ref.shape[0]
    L2 = o_ref.shape[1]

    # input projection
    h0_ref[...] = (jnp.dot(x_ref[0], pw_ref[...],
                           preferred_element_type=jnp.float32) + pb_ref[...])

    # conv1 (k=3, s=2) + ReLU -- taps read with strided loads from VMEM scratch
    acc1 = (jnp.dot(h0_ref[pl.ds(0, L1, stride=2), :], w1_ref[0],
                    preferred_element_type=jnp.float32)
            + jnp.dot(h0_ref[pl.ds(1, L1, stride=2), :], w1_ref[1],
                      preferred_element_type=jnp.float32)
            + jnp.dot(h0_ref[pl.ds(2, L1, stride=2), :], w1_ref[2],
                      preferred_element_type=jnp.float32))
    h1_ref[...] = jnp.maximum(acc1 + b1_ref[...], 0.0)

    # conv2 (k=3, s=2) + ReLU
    acc2 = (jnp.dot(h1_ref[pl.ds(0, L2, stride=2), :], w2_ref[0],
                    preferred_element_type=jnp.float32)
            + jnp.dot(h1_ref[pl.ds(1, L2, stride=2), :], w2_ref[1],
                      preferred_element_type=jnp.float32)
            + jnp.dot(h1_ref[pl.ds(2, L2, stride=2), :], w2_ref[2],
                      preferred_element_type=jnp.float32))
    o_ref[0] = jnp.maximum(acc2 + b2_ref[...], 0.0)


def frontend(x, params):
    # x: (B, T, d_model) channels-last
    B, T, d_model = x.shape
    d_out = params['proj_w'].shape[0]
    L1 = (T - 3) // 2 + 1
    L2 = (L1 - 3) // 2 + 1

    pw = jnp.transpose(params['proj_w'], (1, 0))             # (d_model, d_out)
    w1 = jnp.transpose(params['conv1_w'], (2, 1, 0))         # (3, Cin, Cout)
    w2 = jnp.transpose(params['conv2_w'], (2, 1, 0))

    return pl.pallas_call(
        _frontend_kernel,
        out_shape=jax.ShapeDtypeStruct((B, L2, d_out), jnp.float32),
        grid=(B,),
        in_specs=[
            pl.BlockSpec((1, T, d_model), lambda b: (b, 0, 0)),
            pl.BlockSpec((d_model, d_out), lambda b: (0, 0)),
            pl.BlockSpec((1, d_out), lambda b: (0, 0)),
            pl.BlockSpec((3, d_out, d_out), lambda b: (0, 0, 0)),
            pl.BlockSpec((1, d_out), lambda b: (0, 0)),
            pl.BlockSpec((3, d_out, d_out), lambda b: (0, 0, 0)),
            pl.BlockSpec((1, d_out), lambda b: (0, 0)),
        ],
        out_specs=pl.BlockSpec((1, L2, d_out), lambda b: (b, 0, 0)),
        scratch_shapes=[pltpu.VMEM((T, d_out), jnp.float32),
                        pltpu.VMEM((L1, d_out), jnp.float32)],
        compiler_params=pltpu.CompilerParams(dimension_semantics=("parallel",)),
    )(x, pw, params['proj_b'].reshape(1, d_out),
      w1, params['conv1_b'].reshape(1, d_out),
      w2, params['conv2_b'].reshape(1, d_out))


# ------------------- transformer encoder: one layer / grid step -------------

def _encoder_layer_kernel(x_ref, qw_ref, qb_ref, kw_ref, kb_ref, vw_ref, vb_ref,
                          ow_ref, ob_ref, ln1g_ref, ln1b_ref,
                          f1w_ref, f1b_ref, f2w_ref, f2b_ref,
                          ln2g_ref, ln2b_ref, o_ref, *, nhead, eps):
    layer = pl.program_id(1)

    @pl.when(layer == 0)
    def _():
        o_ref[...] = x_ref[...]            # seed the resident running activation

    x = o_ref[0]                           # (S, D), f32
    S, D = x.shape
    dh = D // nhead
    scale = 1.0 / math.sqrt(dh)

    def layer_norm(v, g, b):
        m = jnp.mean(v, axis=-1, keepdims=True)
        var = jnp.mean((v - m) ** 2, axis=-1, keepdims=True)
        return (v - m) * jax.lax.rsqrt(var + eps) * g + b

    # ---- multi-head self-attention (head-batched, bf16 MXU, f32 softmax) ----
    xb = jnp.broadcast_to(x.astype(jnp.bfloat16), (nhead, S, D))

    def proj(w_ref, b_ref):                # (H,S,D) x (H,D,dh) -> (H,S,dh) f32
        return jnp.einsum('hsd,hdf->hsf', xb, w_ref[0],
                          preferred_element_type=jnp.float32) + b_ref[0]

    q = proj(qw_ref, qb_ref) * scale
    k = proj(kw_ref, kb_ref)
    v = proj(vw_ref, vb_ref)

    s = jnp.einsum('hqd,hkd->hqk', q.astype(jnp.bfloat16), k.astype(jnp.bfloat16),
                   preferred_element_type=jnp.float32)                  # (H,S,S)
    s = s - jnp.max(s, axis=-1, keepdims=True)
    p = jnp.exp(s)
    p = p * pl.reciprocal(jnp.sum(p, axis=-1, keepdims=True), approx=True)

    ctx = jnp.einsum('hqk,hkd->hqd', p.astype(jnp.bfloat16),
                     v.astype(jnp.bfloat16),
                     preferred_element_type=jnp.float32)                # (H,S,dh)
    attn = jnp.einsum('hsd,hdo->hso', ctx.astype(jnp.bfloat16), ow_ref[0],
                      preferred_element_type=jnp.float32)               # (H,S,D)
    attn = jnp.sum(attn, axis=0) + ob_ref[0]                            # (S,D)

    x = layer_norm(x + attn, ln1g_ref[0], ln1b_ref[0])

    # ---- feed-forward (ReLU), bf16 MXU, f32 accumulate ----
    hid = jnp.dot(x.astype(jnp.bfloat16), f1w_ref[0],
                  preferred_element_type=jnp.float32) + f1b_ref[0]
    hid = jnp.maximum(hid, 0.0)
    ffn = jnp.dot(hid.astype(jnp.bfloat16), f2w_ref[0],
                  preferred_element_type=jnp.float32) + f2b_ref[0]
    x = layer_norm(x + ffn, ln2g_ref[0], ln2b_ref[0])

    o_ref[0] = x


def transformer_encoder(x, params, *, nhead, n_layers):
    B, S, D = x.shape
    nl = n_layers
    dh = D // nhead

    qkv_w = params['qkv_w']                      # (nl, 3D, D)  PyTorch layout
    qkv_b = params['qkv_b'][:, 0, :]             # (nl, 3D)

    def head_w(w):                               # (nl, D, D) -> (nl, H, D, dh) bf16
        return (jnp.transpose(w, (0, 2, 1))
                .reshape(nl, D, nhead, dh)
                .transpose(0, 2, 1, 3)
                .astype(jnp.bfloat16))

    def head_b(b):                               # (nl, D) -> (nl, H, 1, dh)
        return b.reshape(nl, nhead, 1, dh)

    qw = head_w(qkv_w[:, :D]);       qb = head_b(qkv_b[:, :D])
    kw = head_w(qkv_w[:, D:2 * D]);  kb = head_b(qkv_b[:, D:2 * D])
    vw = head_w(qkv_w[:, 2 * D:]);   vb = head_b(qkv_b[:, 2 * D:])
    ow = (jnp.transpose(params['out_w'], (0, 2, 1))
          .reshape(nl, nhead, dh, D).astype(jnp.bfloat16))              # (nl,H,dh,D)
    f1w = jnp.transpose(params['f1_w'], (0, 2, 1)).astype(jnp.bfloat16)  # (nl,D,F)
    f2w = jnp.transpose(params['f2_w'], (0, 2, 1)).astype(jnp.bfloat16)  # (nl,F,D)

    weights = [qw, qb, kw, kb, vw, vb, ow, params['out_b'],
               params['ln1_g'], params['ln1_b'],
               f1w, params['f1_b'], f2w, params['f2_b'],
               params['ln2_g'], params['ln2_b']]

    def per_layer_spec(a):
        shape = (1,) + a.shape[1:]
        n = len(shape)
        return pl.BlockSpec(shape, lambda b, l, _n=n: (l,) + (0,) * (_n - 1))

    kernel = functools.partial(_encoder_layer_kernel, nhead=nhead, eps=1e-5)
    return pl.pallas_call(
        kernel,
        out_shape=jax.ShapeDtypeStruct((B, S, D), jnp.float32),
        grid=(B, n_layers),
        in_specs=[pl.BlockSpec((1, S, D), lambda b, l: (b, 0, 0))]
        + [per_layer_spec(a) for a in weights],
        out_specs=pl.BlockSpec((1, S, D), lambda b, l: (b, 0, 0)),
        compiler_params=pltpu.CompilerParams(
            dimension_semantics=("parallel", "arbitrary")),
    )(x, *weights)


# ------------------------------- glue / model -------------------------------

def take_per_row(A, indx, num_elem):
    # A: (B, T, C); indx: (B,) host ints -> gather num_elem rows per batch row.
    all_indx = indx[:, None] + np.arange(num_elem)
    return jnp.take_along_axis(A, jnp.asarray(all_indx)[:, :, None], axis=1)


def init_params(key, d_model, d_out, d_ffn, n_layers):
    ks = jax.random.split(key, 14)

    def w(k, shape, scale=0.05):
        return scale * jax.random.normal(k, shape, jnp.float32)

    nl = n_layers
    return {
        'proj_w': w(ks[0], (d_out, d_model)),
        'proj_b': w(ks[1], (d_out,)),
        'conv1_w': w(ks[2], (d_out, d_out, 3)),
        'conv1_b': w(ks[3], (d_out,)),
        'conv2_w': w(ks[4], (d_out, d_out, 3)),
        'conv2_b': w(ks[5], (d_out,)),
        'qkv_w': w(ks[6], (nl, 3 * d_out, d_out)),
        'qkv_b': w(ks[7], (nl, 1, 3 * d_out)),
        'out_w': w(ks[8], (nl, d_out, d_out)),
        'out_b': w(ks[9], (nl, 1, d_out)),
        'ln1_g': jnp.ones((nl, 1, d_out), jnp.float32),
        'ln1_b': jnp.zeros((nl, 1, d_out), jnp.float32),
        'f1_w': w(ks[10], (nl, d_ffn, d_out)),
        'f1_b': w(ks[11], (nl, 1, d_ffn)),
        'f2_w': w(ks[12], (nl, d_out, d_ffn)),
        'f2_b': w(ks[13], (nl, 1, d_out)),
        'ln2_g': jnp.ones((nl, 1, d_out), jnp.float32),
        'ln2_b': jnp.zeros((nl, 1, d_out), jnp.float32),
    }


def _crops(rng, ts_l, batch):
    temporal_unit = 0
    crop_l = int(rng.randint(low=2 ** (temporal_unit + 1), high=ts_l + 1))
    crop_left = int(rng.randint(ts_l - crop_l + 1))
    crop_right = crop_left + crop_l
    crop_eleft = int(rng.randint(crop_left + 1))
    crop_eright = int(rng.randint(low=crop_right, high=ts_l + 1))
    crop_offset = rng.randint(low=-crop_eleft, high=ts_l - crop_eright + 1, size=batch)
    return crop_l, crop_left, crop_right, crop_eleft, crop_eright, crop_offset


def ts2vec_forward(wave, params, *, nhead, n_layers, inference=False, seed=0):
    # wave: (B, d_model, T)  -- PyTorch NCW input layout.
    x = jnp.transpose(wave, (0, 2, 1))                       # (B, T, d_model)
    x = frontend(x, params)                                  # fused proj+conv+conv
    # x is now (B, ts_l, d_out) == PyTorch's post-subsample .permute(0, 2, 1)
    if inference:
        return transformer_encoder(x, params, nhead=nhead, n_layers=n_layers)
    rng = np.random.RandomState(seed)                        # deterministic crops
    crop_l, crop_left, crop_right, crop_eleft, crop_eright, crop_offset = \
        _crops(rng, x.shape[1], wave.shape[0])
    wave1 = take_per_row(x, crop_offset + crop_eleft, crop_right - crop_eleft)
    wave2 = take_per_row(x, crop_offset + crop_left, crop_eright - crop_left)
    out1 = transformer_encoder(wave1, params, nhead=nhead, n_layers=n_layers)
    out2 = transformer_encoder(wave2, params, nhead=nhead, n_layers=n_layers)
    return out1[:, -crop_l:], out2[:, :crop_l]


# --------------------------- pure-JAX f32 reference --------------------------

def _ref_conv(x, w, b):
    B, T, Cin = x.shape
    L = (T - 3) // 2 + 1
    y = jnp.zeros((B, L, w.shape[0]), jnp.float32)
    for k in range(3):
        y = y + x[:, k:k + 2 * L - 1:2, :] @ w[:, :, k].T
    return jnp.maximum(y + b, 0.0)


def _ref_encoder(x, p, nhead, n_layers):
    D = x.shape[-1]
    dh = D // nhead
    eps = 1e-5
    scale = 1.0 / math.sqrt(dh)

    def ln(v, g, b):
        m = v.mean(-1, keepdims=True)
        var = ((v - m) ** 2).mean(-1, keepdims=True)
        return (v - m) * jax.lax.rsqrt(var + eps) * g + b

    for l in range(n_layers):
        qkv = x @ p['qkv_w'][l].T + p['qkv_b'][l]
        q, k, v = qkv[..., :D], qkv[..., D:2 * D], qkv[..., 2 * D:]
        heads = []
        for h in range(nhead):
            sl = slice(h * dh, (h + 1) * dh)
            s = (q[..., sl] * scale) @ jnp.swapaxes(k[..., sl], -1, -2)
            s = s - s.max(-1, keepdims=True)
            pr = jnp.exp(s)
            pr = pr / pr.sum(-1, keepdims=True)
            heads.append(pr @ v[..., sl])
        attn = jnp.concatenate(heads, -1) @ p['out_w'][l].T + p['out_b'][l]
        x = ln(x + attn, p['ln1_g'][l], p['ln1_b'][l])
        hid = jnp.maximum(x @ p['f1_w'][l].T + p['f1_b'][l], 0.0)
        x = ln(x + hid @ p['f2_w'][l].T + p['f2_b'][l], p['ln2_g'][l], p['ln2_b'][l])
    return x


def _ref_forward(wave, p, *, nhead, n_layers, inference=False, seed=0):
    x = jnp.transpose(wave, (0, 2, 1)) @ p['proj_w'].T + p['proj_b']
    x = _ref_conv(x, p['conv1_w'], p['conv1_b'])
    x = _ref_conv(x, p['conv2_w'], p['conv2_b'])
    if inference:
        return _ref_encoder(x, p, nhead, n_layers)
    rng = np.random.RandomState(seed)
    crop_l, crop_left, crop_right, crop_eleft, crop_eright, crop_offset = \
        _crops(rng, x.shape[1], wave.shape[0])
    w1 = take_per_row(x, crop_offset + crop_eleft, crop_right - crop_eleft)
    w2 = take_per_row(x, crop_offset + crop_left, crop_eright - crop_left)
    return (_ref_encoder(w1, p, nhead, n_layers)[:, -crop_l:],
            _ref_encoder(w2, p, nhead, n_layers)[:, :crop_l])


# ----------------------------------- main ------------------------------------

if __name__ == "__main__":
    B, d_model, T = 2, 8, 64
    d_out, d_ffn, nhead, n_layers = 32, 64, 4, 2

    key = jax.random.PRNGKey(0)
    kp, kx = jax.random.split(key)
    params = init_params(kp, d_model, d_out, d_ffn, n_layers)
    wave = jax.random.normal(kx, (B, d_model, T), jnp.float32)

    # training-mode path (module default: inference=False, mask_latent=False)
    out1, out2 = ts2vec_forward(wave, params, nhead=nhead, n_layers=n_layers,
                                inference=False, seed=0)
    out1 = jax.block_until_ready(out1)
    out2 = jax.block_until_ready(out2)

    # inference-mode path
    out_inf = jax.block_until_ready(
        ts2vec_forward(wave, params, nhead=nhead, n_layers=n_layers, inference=True))

    # verify against a pure-JAX f32 reference (bf16 MXU + approx reciprocal in the
    # kernel => slightly loosened tolerances)
    r1, r2 = _ref_forward(wave, params, nhead=nhead, n_layers=n_layers,
                          inference=False, seed=0)
    r_inf = _ref_forward(wave, params, nhead=nhead, n_layers=n_layers, inference=True)
    np.testing.assert_allclose(np.asarray(out1), np.asarray(r1), atol=3e-2, rtol=3e-2)
    np.testing.assert_allclose(np.asarray(out2), np.asarray(r2), atol=3e-2, rtol=3e-2)
    np.testing.assert_allclose(np.asarray(out_inf), np.asarray(r_inf),
                               atol=3e-2, rtol=3e-2)
    assert np.isfinite(np.asarray(out1)).all()
    assert np.isfinite(np.asarray(out2)).all()
    assert np.isfinite(np.asarray(out_inf)).all()

    print("KERNEL_OK")
</pallas_src>

<mosaic_0001>
module attributes {stable_mosaic.version = 11 : i64} {
  func.func @_frontend_kernel(%arg0: i32, %arg1: memref<1x64x8xf32, #tpu.memory_space<vmem>>, %arg2: memref<8x32xf32, #tpu.memory_space<vmem>>, %arg3: memref<1x32xf32, #tpu.memory_space<vmem>>, %arg4: memref<3x32x32xf32, #tpu.memory_space<vmem>>, %arg5: memref<1x32xf32, #tpu.memory_space<vmem>>, %arg6: memref<3x32x32xf32, #tpu.memory_space<vmem>>, %arg7: memref<1x32xf32, #tpu.memory_space<vmem>>, %arg8: memref<1x15x32xf32, #tpu.memory_space<vmem>>, %arg9: memref<64x32xf32, #tpu.memory_space<vmem>>, %arg10: memref<31x32xf32, #tpu.memory_space<vmem>>) attributes {dimension_semantics = [#tpu.dimension_semantics<parallel>], iteration_bounds = array<i64: 2>, scalar_prefetch = 0 : i64, scratch_operands = 2 : i64, tpu.core_type = #tpu.core_type<tc>, window_params = [{transform_indices = @transform_0, window_bounds = array<i64: 1, 64, 8>}, {pipeline_mode = #tpu.pipeline_mode<synchronous>, transform_indices = @transform_1, window_bounds = array<i64: 8, 32>}, {pipeline_mode = #tpu.pipeline_mode<synchronous>, transform_indices = @transform_2, window_bounds = array<i64: 1, 32>}, {pipeline_mode = #tpu.pipeline_mode<synchronous>, transform_indices = @transform_3, window_bounds = array<i64: 3, 32, 32>}, {pipeline_mode = #tpu.pipeline_mode<synchronous>, transform_indices = @transform_4, window_bounds = array<i64: 1, 32>}, {pipeline_mode = #tpu.pipeline_mode<synchronous>, transform_indices = @transform_5, window_bounds = array<i64: 3, 32, 32>}, {pipeline_mode = #tpu.pipeline_mode<synchronous>, transform_indices = @transform_6, window_bounds = array<i64: 1, 32>}, {transform_indices = @transform_7, window_bounds = array<i64: 1, 15, 32>}]} {
    %c0 = arith.constant 0 : index
    %c0_0 = arith.constant 0 : index
    %c0_1 = arith.constant 0 : index
    %0 = vector.load %arg1[%c0, %c0_0, %c0_1] : memref<1x64x8xf32, #tpu.memory_space<vmem>>, vector<1x64x8xf32>
    %1 = vector.shape_cast %0 : vector<1x64x8xf32> to vector<64x8xf32>
    %c0_2 = arith.constant 0 : index
    %c0_3 = arith.constant 0 : index
    %2 = vector.load %arg2[%c0_2, %c0_3] : memref<8x32xf32, #tpu.memory_space<vmem>>, vector<8x32xf32>
    %cst = arith.constant dense<0.000000e+00> : vector<64x32xf32>
    %3 = tpu.matmul %1, %2, %cst {dimension_numbers = #tpu.dot_dimension_numbers<[1], [0], [0], [1], [0, 0, 1, 1], [], []>} : vector<64x8xf32>, vector<8x32xf32>, vector<64x32xf32> -> vector<64x32xf32>
    %c0_4 = arith.constant 0 : index
    %c0_5 = arith.constant 0 : index
    %4 = vector.load %arg3[%c0_4, %c0_5] : memref<1x32xf32, #tpu.memory_space<vmem>>, vector<1x32xf32>
    %5 = vector.broadcast %4 : vector<1x32xf32> to vector<64x32xf32>
    %6 = arith.addf %3, %5 : vector<64x32xf32>
    %c0_6 = arith.constant 0 : index
    %c0_7 = arith.constant 0 : index
    %7 = vector.load %arg9[%c0_6, %c0_7] : memref<64x32xf32, #tpu.memory_space<vmem>>, vector<64x32xf32>
    tpu.vector_store %arg9[%c0_6, %c0_7], %6 {strides = array<i32>} : memref<64x32xf32, #tpu.memory_space<vmem>>, vector<64x32xf32>,
    %c0_8 = arith.constant 0 : index
    %c0_9 = arith.constant 0 : index
    %8 = tpu.strided_load %arg9[%c0_8, %c0_9] {strides = array<i32: 2, 1>} : memref<64x32xf32, #tpu.memory_space<vmem>>, vector<31x32xf32>
    %c0_10 = arith.constant 0 : index
    %c0_11 = arith.constant 0 : index
    %c0_12 = arith.constant 0 : index
    %9 = vector.load %arg4[%c0_10, %c0_11, %c0_12] : memref<3x32x32xf32, #tpu.memory_space<vmem>>, vector<1x32x32xf32>
    %10 = vector.shape_cast %9 : vector<1x32x32xf32> to vector<32x32xf32>
    %cst_13 = arith.constant dense<0.000000e+00> : vector<31x32xf32>
    %11 = tpu.matmul %8, %10, %cst_13 {dimension_numbers = #tpu.dot_dimension_numbers<[1], [0], [0], [1], [0, 0, 1, 1], [], []>} : vector<31x32xf32>, vector<32x32xf32>, vector<31x32xf32> -> vector<31x32xf32>
    %c1 = arith.constant 1 : index
    %c0_14 = arith.constant 0 : index
    %12 = tpu.strided_load %arg9[%c1, %c0_14] {strides = array<i32: 2, 1>} : memref<64x32xf32, #tpu.memory_space<vmem>>, vector<31x32xf32>
    %c1_15 = arith.constant 1 : index
    %c0_16 = arith.constant 0 : index
    %c0_17 = arith.constant 0 : index
    %13 = vector.load %arg4[%c1_15, %c0_16, %c0_17] : memref<3x32x32xf32, #tpu.memory_space<vmem>>, vector<1x32x32xf32>
    %14 = vector.shape_cast %13 : vector<1x32x32xf32> to vector<32x32xf32>
    %cst_18 = arith.constant dense<0.000000e+00> : vector<31x32xf32>
    %15 = tpu.matmul %12, %14, %cst_18 {dimension_numbers = #tpu.dot_dimension_numbers<[1], [0], [0], [1], [0, 0, 1, 1], [], []>} : vector<31x32xf32>, vector<32x32xf32>, vector<31x32xf32> -> vector<31x32xf32>
    %16 = arith.addf %11, %15 : vector<31x32xf32>
    %c2 = arith.constant 2 : index
    %c0_19 = arith.constant 0 : index
    %17 = tpu.strided_load %arg9[%c2, %c0_19] {strides = array<i32: 2, 1>} : memref<64x32xf32, #tpu.memory_space<vmem>>, vector<31x32xf32>
    %c2_20 = arith.constant 2 : index
    %c0_21 = arith.constant 0 : index
    %c0_22 = arith.constant 0 : index
    %18 = vector.load %arg4[%c2_20, %c0_21, %c0_22] : memref<3x32x32xf32, #tpu.memory_space<vmem>>, vector<1x32x32xf32>
    %19 = vector.shape_cast %18 : vector<1x32x32xf32> to vector<32x32xf32>
    %cst_23 = arith.constant dense<0.000000e+00> : vector<31x32xf32>
    %20 = tpu.matmul %17, %19, %cst_23 {dimension_numbers = #tpu.dot_dimension_numbers<[1], [0], [0], [1], [0, 0, 1, 1], [], []>} : vector<31x32xf32>, vector<32x32xf32>, vector<31x32xf32> -> vector<31x32xf32>
    %21 = arith.addf %16, %20 : vector<31x32xf32>
    %c0_24 = arith.constant 0 : index
    %c0_25 = arith.constant 0 : index
    %22 = vector.load %arg5[%c0_24, %c0_25] : memref<1x32xf32, #tpu.memory_space<vmem>>, vector<1x32xf32>
    %23 = vector.broadcast %22 : vector<1x32xf32> to vector<31x32xf32>
    %24 = arith.addf %21, %23 : vector<31x32xf32>
    %cst_26 = arith.constant 0.000000e+00 : f32
    %25 = vector.broadcast %cst_26 : f32 to vector<31x32xf32>
    %26 = arith.maximumf %24, %25 : vector<31x32xf32>
    %c0_27 = arith.constant 0 : index
    %c0_28 = arith.constant 0 : index
    %27 = vector.load %arg10[%c0_27, %c0_28] : memref<31x32xf32, #tpu.memory_space<vmem>>, vector<31x32xf32>
    tpu.vector_store %arg10[%c0_27, %c0_28], %26 {strides = array<i32>} : memref<31x32xf32, #tpu.memory_space<vmem>>, vector<31x32xf32>,
    %c0_29 = arith.constant 0 : index
    %c0_30 = arith.constant 0 : index
    %28 = tpu.strided_load %arg10[%c0_29, %c0_30] {strides = array<i32: 2, 1>} : memref<31x32xf32, #tpu.memory_space<vmem>>, vector<15x32xf32>
    %c0_31 = arith.constant 0 : index
    %c0_32 = arith.constant 0 : index
    %c0_33 = arith.constant 0 : index
    %29 = vector.load %arg6[%c0_31, %c0_32, %c0_33] : memref<3x32x32xf32, #tpu.memory_space<vmem>>, vector<1x32x32xf32>
    %30 = vector.shape_cast %29 : vector<1x32x32xf32> to vector<32x32xf32>
    %cst_34 = arith.constant dense<0.000000e+00> : vector<15x32xf32>
    %31 = tpu.matmul %28, %30, %cst_34 {dimension_numbers = #tpu.dot_dimension_numbers<[1], [0], [0], [1], [0, 0, 1, 1], [], []>} : vector<15x32xf32>, vector<32x32xf32>, vector<15x32xf32> -> vector<15x32xf32>
    %c1_35 = arith.constant 1 : index
    %c0_36 = arith.constant 0 : index
    %32 = tpu.strided_load %arg10[%c1_35, %c0_36] {strides = array<i32: 2, 1>} : memref<31x32xf32, #tpu.memory_space<vmem>>, vector<15x32xf32>
    %c1_37 = arith.constant 1 : index
    %c0_38 = arith.constant 0 : index
    %c0_39 = arith.constant 0 : index
    %33 = vector.load %arg6[%c1_37, %c0_38, %c0_39] : memref<3x32x32xf32, #tpu.memory_space<vmem>>, vector<1x32x32xf32>
    %34 = vector.shape_cast %33 : vector<1x32x32xf32> to vector<32x32xf32>
    %cst_40 = arith.constant dense<0.000000e+00> : vector<15x32xf32>
    %35 = tpu.matmul %32, %34, %cst_40 {dimension_numbers = #tpu.dot_dimension_numbers<[1], [0], [0], [1], [0, 0, 1, 1], [], []>} : vector<15x32xf32>, vector<32x32xf32>, vector<15x32xf32> -> vector<15x32xf32>
    %36 = arith.addf %31, %35 : vector<15x32xf32>
    %c2_41 = arith.constant 2 : index
    %c0_42 = arith.constant 0 : index
    %37 = tpu.strided_load %arg10[%c2_41, %c0_42] {strides = array<i32: 2, 1>} : memref<31x32xf32, #tpu.memory_space<vmem>>, vector<15x32xf32>
    %c2_43 = arith.constant 2 : index
    %c0_44 = arith.constant 0 : index
    %c0_45 = arith.constant 0 : index
    %38 = vector.load %arg6[%c2_43, %c0_44, %c0_45] : memref<3x32x32xf32, #tpu.memory_space<vmem>>, vector<1x32x32xf32>
    %39 = vector.shape_cast %38 : vector<1x32x32xf32> to vector<32x32xf32>
    %cst_46 = arith.constant dense<0.000000e+00> : vector<15x32xf32>
    %40 = tpu.matmul %37, %39, %cst_46 {dimension_numbers = #tpu.dot_dimension_numbers<[1], [0], [0], [1], [0, 0, 1, 1], [], []>} : vector<15x32xf32>, vector<32x32xf32>, vector<15x32xf32> -> vector<15x32xf32>
    %41 = arith.addf %36, %40 : vector<15x32xf32>
    %c0_47 = arith.constant 0 : index
    %c0_48 = arith.constant 0 : index
    %42 = vector.load %arg7[%c0_47, %c0_48] : memref<1x32xf32, #tpu.memory_space<vmem>>, vector<1x32xf32>
    %43 = vector.broadcast %42 : vector<1x32xf32> to vector<15x32xf32>
    %44 = arith.addf %41, %43 : vector<15x32xf32>
    %cst_49 = arith.constant 0.000000e+00 : f32
    %45 = vector.broadcast %cst_49 : f32 to vector<15x32xf32>
    %46 = arith.maximumf %44, %45 : vector<15x32xf32>
    %c0_50 = arith.constant 0 : index
    %c0_51 = arith.constant 0 : index
    %c0_52 = arith.constant 0 : index
    %47 = vector.load %arg8[%c0_50, %c0_51, %c0_52] : memref<1x15x32xf32, #tpu.memory_space<vmem>>, vector<1x15x32xf32>
    %48 = vector.shape_cast %47 : vector<1x15x32xf32> to vector<15x32xf32>
    %49 = vector.shape_cast %46 : vector<15x32xf32> to vector<1x15x32xf32>
    tpu.vector_store %arg8[%c0_50, %c0_51, %c0_52], %49 {strides = array<i32>} : memref<1x15x32xf32, #tpu.memory_space<vmem>>, vector<1x15x32xf32>,
    return
  }
  func.func @transform_0(%arg0: i32) -> (i32, i32, i32) {
    %c0_i32 = arith.constant 0 : i32
    %c0_i32_0 = arith.constant 0 : i32
    %c0_i32_1 = arith.constant 0 : i32
    return %arg0, %c0_i32, %c0_i32_0 : i32, i32, i32
  }
  func.func @transform_1(%arg0: i32) -> (i32, i32) {
    %c0_i32 = arith.constant 0 : i32
    %c0_i32_0 = arith.constant 0 : i32
    %c0_i32_1 = arith.constant 0 : i32
    return %c0_i32, %c0_i32_0 : i32, i32
  }
  func.func @transform_2(%arg0: i32) -> (i32, i32) {
    %c0_i32 = arith.constant 0 : i32
    %c0_i32_0 = arith.constant 0 : i32
    %c0_i32_1 = arith.constant 0 : i32
    return %c0_i32, %c0_i32_0 : i32, i32
  }
  func.func @transform_3(%arg0: i32) -> (i32, i32, i32) {
    %c0_i32 = arith.constant 0 : i32
    %c0_i32_0 = arith.constant 0 : i32
    %c0_i32_1 = arith.constant 0 : i32
    %c0_i32_2 = arith.constant 0 : i32
    return %c0_i32, %c0_i32_0, %c0_i32_1 : i32, i32, i32
  }
  func.func @transform_4(%arg0: i32) -> (i32, i32) {
    %c0_i32 = arith.constant 0 : i32
    %c0_i32_0 = arith.constant 0 : i32
    %c0_i32_1 = arith.constant 0 : i32
    return %c0_i32, %c0_i32_0 : i32, i32
  }
  func.func @transform_5(%arg0: i32) -> (i32, i32, i32) {
    %c0_i32 = arith.constant 0 : i32
    %c0_i32_0 = arith.constant 0 : i32
    %c0_i32_1 = arith.constant 0 : i32
    %c0_i32_2 = arith.constant 0 : i32
    return %c0_i32, %c0_i32_0, %c0_i32_1 : i32, i32, i32
  }
  func.func @transform_6(%arg0: i32) -> (i32, i32) {
    %c0_i32 = arith.constant 0 : i32
    %c0_i32_0 = arith.constant 0 : i32
    %c0_i32_1 = arith.constant 0 : i32
    return %c0_i32, %c0_i32_0 : i32, i32
  }
  func.func @transform_7(%arg0: i32) -> (i32, i32, i32) {
    %c0_i32 = arith.constant 0 : i32
    %c0_i32_0 = arith.constant 0 : i32
    %c0_i32_1 = arith.constant 0 : i32
    return %arg0, %c0_i32, %c0_i32_0 : i32, i32, i32
  }
}

</mosaic_0001>

<llo_original>
// kernel: tpu_custom_call.1
$region0: #{tpu_custom_call.1}
  #allocation0 [shape = 'u32[]', space=smem, size = 0x4, offset = 0x4, fixed_abs, tag = 'smem constant byte address 0x4 - core index']
  #allocation1 [shape = 'u32[144,128]{1,0:T(1,128)}', space=vmem, size = 0x12000, scoped, tag = 'internal scratch']
  #allocation2 [shape = 'f32[64,32]{1,0:T(8,128)}', space=vmem, size = 0x8000, scoped, tag = 'scratch operand']
  #allocation3 [shape = 'f32[31,32]{1,0:T(8,128)}', space=vmem, size = 0x4000, scoped, tag = 'scratch operand']
  %s0 = inlined_call_operand.vmem [shape: f32[2,64,8], index: 0, kind: input, shape index: {}]
  %s1 = inlined_call_operand.vmem [shape: f32[8,32], index: 1, kind: input, shape index: {}]
  %s2 = inlined_call_operand.vmem [shape: f32[1,32], index: 2, kind: input, shape index: {}]
  %s3 = inlined_call_operand.vmem [shape: f32[3,32,32], index: 3, kind: input, shape index: {}]
  %s4 = inlined_call_operand.vmem [shape: f32[1,32], index: 4, kind: input, shape index: {}]
  %s5 = inlined_call_operand.hbm [shape: f32[3,32,32], index: 5, kind: input, shape index: {}]
  %s6 = inlined_call_operand.vmem [shape: f32[1,32], index: 6, kind: input, shape index: {}]
  %s7 = inlined_call_operand.vmem [shape: f32[2,15,32], index: 7, kind: output, shape index: {}]
  %s8 = sld [smem:[#allocation0]]
  $region65: #{tpu_custom_call.1} parent=0
    _
  %s10 = ssub.s32 1, %s8
  %s11 = scalar_select 0, %s10, %s8
  $region1: #{tpu_custom_call.1} parent=0
    #allocation4 [shape = 'u8[49152]{0}', space=vmem, size = 0xc000, scoped, tag = 'input window, operand 5, single buffered']
    #allocation5 [shape = 's32[2]{0}', space=sflag, size = 0x8, scoped, tag = 'scoped memory for tpu_custom_call.1']
    %12 = vsyncpa [#allocation5], 0
    loop: start=0, step=1, limit=4
    $region2: #{tpu_custom_call.1} parent=1 // loop_pre_header
      _
    $region3: #{tpu_custom_call.1} parent=1 // loop_header
      %s14 = sphi 0, %s18
      %p15 = scmp.ge.s32.totalorder %s14, 4
      %s24 = sphi 0, %s26
      %s27 = sphi 0, %s24
      %s28 = sphi 0, %s27
      %s44 = sphi 0, %s28
      %s48 = sphi 0, %s48
      %s50 = sphi 0, %s48
      %s51 = sphi 0, %s50
      %s65 = sphi 0, %s51
      %s69 = sphi 0, %s69
      %s71 = sphi 0, %s69
      %s72 = sphi 0, %s71
      %s86 = sphi 0, %s72
      %s90 = sphi 0, %s90
      %s92 = sphi 0, %s90
      %s93 = sphi 0, %s92
      %s107 = sphi 0, %s93
      %s111 = sphi 0, %s111
      %s113 = sphi 0, %s111
      %s114 = sphi 0, %s113
      %s128 = sphi 0, %s114
      %s132 = sphi 0, %s132
      %s134 = sphi 0, %s132
      %s135 = sphi 0, %s134
      %s149 = sphi 0, %s135
      %s153 = sphi 0, %s153
      %s155 = sphi 0, %s153
      %s156 = sphi 0, %s155
      %s170 = sphi 0, %s156
      %s176 = sphi 0, %s178
      %s179 = sphi 0, %s176
      %s180 = sphi 0, %s179
      %s196 = sphi 0, %s180
    $region4: #{tpu_custom_call.1} parent=1 // loop_header_branch
      %17 = sbr.rel (%p15) target = $region8
    $region5: #{tpu_custom_call.1} parent=1 // loop_body
      %s19 = ssub.s32 %s14, 1
      %s20 = ssub.s32 %s14, 2
      %s21 = sadd.s32 %s14, 1
      %s22 = ssub.s32 %s14, %s21
      %p23 = scmp.eq.s32.totalorder %s22, 0
      %s25 = sadd.s32 %s24, 1
      %s26 = scalar_select %p23, %s24, %s25
      %p29 = pneg %p23
      %p30 = scmp.eq.s32.totalorder %s14, 1
      %p31 = por %p29, %p30
      %p32 = scmp.ne.s32.totalorder %s24, %s27
      %p33 = scmp.eq.s32.totalorder %s14, 0
      %p34 = por %p32, %p33
      %p35 = scmp.ne.s32.totalorder %s24, %s27
      %p36 = scmp.eq.s32.totalorder %s19, 1
      %p37 = por %p35, %p36
      %p38 = scmp.ne.s32.totalorder %s27, %s28
      %p39 = scmp.eq.s32.totalorder %s19, 0
      %p40 = por %p38, %p39
      %p41 = scmp.ne.s32.totalorder %s27, %s28
      %p42 = scmp.eq.s32.totalorder %s20, 1
      %p43 = por %p41, %p42
      %p45 = scmp.ne.s32.totalorder %s28, %s44
      %p46 = scmp.eq.s32.totalorder %s20, 0
      %p47 = por %p45, %p46
      %s49 = sadd.s32 %s48, 1
      %p52 = scmp.eq.s32.totalorder %s14, 1
      %p53 = scmp.ne.s32.totalorder %s48, %s50
      %p54 = scmp.eq.s32.totalorder %s14, 0
      %p55 = por %p53, %p54
      %p56 = scmp.ne.s32.totalorder %s48, %s50
      %p57 = scmp.eq.s32.totalorder %s19, 1
      %p58 = por %p56, %p57
      %p59 = scmp.ne.s32.totalorder %s50, %s51
      %p60 = scmp.eq.s32.totalorder %s19, 0
      %p61 = por %p59, %p60
      %p62 = scmp.ne.s32.totalorder %s50, %s51
      %p63 = scmp.eq.s32.totalorder %s20, 1
      %p64 = por %p62, %p63
      %p66 = scmp.ne.s32.totalorder %s51, %s65
      %p67 = scmp.eq.s32.totalorder %s20, 0
      %p68 = por %p66, %p67
      %s70 = sadd.s32 %s69, 1
      %p73 = scmp.eq.s32.totalorder %s14, 1
      %p74 = scmp.ne.s32.totalorder %s69, %s71
      %p75 = scmp.eq.s32.totalorder %s14, 0
      %p76 = por %p74, %p75
      %p77 = scmp.ne.s32.totalorder %s69, %s71
      %p78 = scmp.eq.s32.totalorder %s19, 1
      %p79 = por %p77, %p78
      %p80 = scmp.ne.s32.totalorder %s71, %s72
      %p81 = scmp.eq.s32.totalorder %s19, 0
      %p82 = por %p80, %p81
      %p83 = scmp.ne.s32.totalorder %s71, %s72
      %p84 = scmp.eq.s32.totalorder %s20, 1
      %p85 = por %p83, %p84
      %p87 = scmp.ne.s32.totalorder %s72, %s86
      %p88 = scmp.eq.s32.totalorder %s20, 0
      %p89 = por %p87, %p88
      %s91 = sadd.s32 %s90, 1
      %p94 = scmp.eq.s32.totalorder %s14, 1
      %p95 = scmp.ne.s32.totalorder %s90, %s92
      %p96 = scmp.eq.s32.totalorder %s14, 0
      %p97 = por %p95, %p96
      %p98 = scmp.ne.s32.totalorder %s90, %s92
      %p99 = scmp.eq.s32.totalorder %s19, 1
      %p100 = por %p98, %p99
      %p101 = scmp.ne.s32.totalorder %s92, %s93
      %p102 = scmp.eq.s32.totalorder %s19, 0
      %p103 = por %p101, %p102
      %p104 = scmp.ne.s32.totalorder %s92, %s93
      %p105 = scmp.eq.s32.totalorder %s20, 1
      %p106 = por %p104, %p105
      %p108 = scmp.ne.s32.totalorder %s93, %s107
      %p109 = scmp.eq.s32.totalorder %s20, 0
      %p110 = por %p108, %p109
      %s112 = sadd.s32 %s111, 1
      %p115 = scmp.eq.s32.totalorder %s14, 1
      %p116 = scmp.ne.s32.totalorder %s111, %s113
      %p117 = scmp.eq.s32.totalorder %s14, 0
      %p118 = por %p116, %p117
      %p119 = scmp.ne.s32.totalorder %s111, %s113
      %p120 = scmp.eq.s32.totalorder %s19, 1
      %p121 = por %p119, %p120
      %p122 = scmp.ne.s32.totalorder %s113, %s114
      %p123 = scmp.eq.s32.totalorder %s19, 0
      %p124 = por %p122, %p123
      %p125 = scmp.ne.s32.totalorder %s113, %s114
      %p126 = scmp.eq.s32.totalorder %s20, 1
      %p127 = por %p125, %p126
      %p129 = scmp.ne.s32.totalorder %s114, %s128
      %p130 = scmp.eq.s32.totalorder %s20, 0
      %p131 = por %p129, %p130
      %s133 = sadd.s32 %s132, 1
      %p136 = scmp.eq.s32.totalorder %s14, 1
      %p137 = scmp.ne.s32.totalorder %s132, %s134
      %p138 = scmp.eq.s32.totalorder %s14, 0
      %p139 = por %p137, %p138
      %p140 = scmp.ne.s32.totalorder %s132, %s134
      %p141 = scmp.eq.s32.totalorder %s19, 1
      %p142 = por %p140, %p141
      %p143 = scmp.ne.s32.totalorder %s134, %s135
      %p144 = scmp.eq.s32.totalorder %s19, 0
      %p145 = por %p143, %p144
      %p146 = scmp.ne.s32.totalorder %s134, %s135
      %p147 = scmp.eq.s32.totalorder %s20, 1
      %p148 = por %p146, %p147
      %p150 = scmp.ne.s32.totalorder %s135, %s149
      %p151 = scmp.eq.s32.totalorder %s20, 0
      %p152 = por %p150, %p151
      %s154 = sadd.s32 %s153, 1
      %p157 = scmp.eq.s32.totalorder %s14, 1
      %p158 = scmp.ne.s32.totalorder %s153, %s155
      %p159 = scmp.eq.s32.totalorder %s14, 0
      %p160 = por %p158, %p159
      %p161 = scmp.ne.s32.totalorder %s153, %s155
      %p162 = scmp.eq.s32.totalorder %s19, 1
      %p163 = por %p161, %p162
      %p164 = scmp.ne.s32.totalorder %s155, %s156
      %p165 = scmp.eq.s32.totalorder %s19, 0
      %p166 = por %p164, %p165
      %p167 = scmp.ne.s32.totalorder %s155, %s156
      %p168 = scmp.eq.s32.totalorder %s20, 1
      %p169 = por %p167, %p168
      %p171 = scmp.ne.s32.totalorder %s156, %s170
      %p172 = scmp.eq.s32.totalorder %s20, 0
      %p173 = por %p171, %p172
      %s174 = ssub.s32 %s14, %s21
      %p175 = scmp.eq.s32.totalorder %s174, 0
      %s177 = sadd.s32 %s176, 1
      %s178 = scalar_select %p175, %s176, %s177
      %p181 = pneg %p175
      %p182 = scmp.eq.s32.totalorder %s14, 1
      %p183 = por %p181, %p182
      %p184 = scmp.ne.s32.totalorder %s176, %s179
      %p185 = scmp.eq.s32.totalorder %s14, 0
      %p186 = por %p184, %p185
      %p187 = scmp.ne.s32.totalorder %s176, %s179
      %p188 = scmp.eq.s32.totalorder %s19, 1
      %p189 = por %p187, %p188
      %p190 = scmp.ne.s32.totalorder %s179, %s180
      %p191 = scmp.eq.s32.totalorder %s19, 0
      %p192 = por %p190, %p191
      %p193 = scmp.ne.s32.totalorder %s179, %s180
      %p194 = scmp.eq.s32.totalorder %s20, 1
      %p195 = por %p193, %p194
      %p197 = scmp.ne.s32.totalorder %s180, %s196
      %p198 = scmp.eq.s32.totalorder %s20, 0
      %p199 = por %p197, %p198
      %p200 = scmp.le.s32.totalorder 1, %s14
      %p201 = scmp.lt.s32.totalorder %s14, 3
      %p202 = pnand %p200, %p201
      %p203 = pneg %p202
      // Predicated region
      $region9: #{tpu_custom_call.1} parent=5 // pred_check
        _
      $region10: #{tpu_custom_call.1} parent=5 // pred_check_branch
        %205 = sbr.rel (%p202) target = $region12
      $region11: #{tpu_custom_call.1} parent=5 // pred_region
        %s206 = ssub.s32 %s14, 1
        // Predicated region
        $region13: #{tpu_custom_call.1} parent=11 // pred_check
          %p207 = pneg %p61
        $region14: #{tpu_custom_call.1} parent=11 // pred_check_branch
          %209 = sbr.rel (%p207) target = $region16
        $region15: #{tpu_custom_call.1} parent=11 // pred_region
          _
        $region16: #{tpu_custom_call.1} parent=11 // pred_fallthru
          _
        // Predicated region
        $region17: #{tpu_custom_call.1} parent=11 // pred_check
          %p210 = pneg %p82
        $region18: #{tpu_custom_call.1} parent=11 // pred_check_branch
          %212 = sbr.rel (%p210) target = $region20
        $region19: #{tpu_custom_call.1} parent=11 // pred_region
          _
        $region20: #{tpu_custom_call.1} parent=11 // pred_fallthru
          _
        // Predicated region
        $region21: #{tpu_custom_call.1} parent=11 // pred_check
          %p213 = pneg %p103
        $region22: #{tpu_custom_call.1} parent=11 // pred_check_branch
          %215 = sbr.rel (%p213) target = $region24
        $region23: #{tpu_custom_call.1} parent=11 // pred_region
          _
        $region24: #{tpu_custom_call.1} parent=11 // pred_fallthru
          _
        // Predicated region
        $region25: #{tpu_custom_call.1} parent=11 // pred_check
          %p216 = pneg %p124
        $region26: #{tpu_custom_call.1} parent=11 // pred_check_branch
          %218 = sbr.rel (%p216) target = $region28
        $region27: #{tpu_custom_call.1} parent=11 // pred_region
          _
        $region28: #{tpu_custom_call.1} parent=11 // pred_fallthru
          _
        // Predicated region
        $region29: #{tpu_custom_call.1} parent=11 // pred_check
          %p219 = pneg %p145
        $region30: #{tpu_custom_call.1} parent=11 // pred_check_branch
          %221 = sbr.rel (%p219) target = $region32
        $region31: #{tpu_custom_call.1} parent=11 // pred_region
          %s223 = ssub.s32 1536, 1536
          %224 = vsyncadd [#allocation5], %s223
          %s225 = sshll.u32 [#allocation4], 4
          %s226 = int_to_ptr.vmem [resolvable:$true] %s225
          %231 = dma.hbm_to_vmem [thread:$0]  %s5, 1536, %s226, [#allocation5], 128, 128, 8
        $region32: #{tpu_custom_call.1} parent=11 // pred_fallthru
          _
        // Predicated region
        $region33: #{tpu_custom_call.1} parent=11 // pred_check
          %p232 = pneg %p166
        $region34: #{tpu_custom_call.1} parent=11 // pred_check_branch
          %234 = sbr.rel (%p232) target = $region36
        $region35: #{tpu_custom_call.1} parent=11 // pred_region
          _
        $region36: #{tpu_custom_call.1} parent=11 // pred_fallthru
          _
      $region12: #{tpu_custom_call.1} parent=5 // pred_fallthru
        _
      %p235 = scmp.lt.s32.totalorder %s14, 2
      // Predicated region
      $region37: #{tpu_custom_call.1} parent=5 // pred_check
        %p236 = pneg %p235
      $region38: #{tpu_custom_call.1} parent=5 // pred_check_branch
        %238 = sbr.rel (%p236) target = $region40
      $region39: #{tpu_custom_call.1} parent=5 // pred_region
        // Predicated region
        $region41: #{tpu_custom_call.1} parent=39 // pred_check
          %p239 = pneg %p34
        $region42: #{tpu_custom_call.1} parent=39 // pred_check_branch
          %241 = sbr.rel (%p239) target = $region44
        $region43: #{tpu_custom_call.1} parent=39 // pred_region
          %p242 = scmp.lt.s32.totalorder %s14, 1
          %s243 = scalar_select %p242, %s14, 1
          %s244 = smul.addr %s243, 8
          %s245 = smul.addr %s244, 8
          %s246 = scalar_lea.vmem %s0, %s245
        $region44: #{tpu_custom_call.1} parent=39 // pred_fallthru
          _
      $region40: #{tpu_custom_call.1} parent=5 // pred_fallthru
        _
      %p247 = scmp.le.s32.totalorder 1, %s14
      %p248 = scmp.lt.s32.totalorder %s14, 3
      %p249 = pnand %p247, %p248
      %p250 = pneg %p249
      // Predicated region
      $region45: #{tpu_custom_call.1} parent=5 // pred_check
        _
      $region46: #{tpu_custom_call.1} parent=5 // pred_check_branch
        %252 = sbr.rel (%p249) target = $region48
      $region47: #{tpu_custom_call.1} parent=5 // pred_region
        %s253 = ssub.s32 %s14, 1
        // Predicated region
        $region49: #{tpu_custom_call.1} parent=47 // pred_check
          %p254 = pneg %p145
        $region50: #{tpu_custom_call.1} parent=47 // pred_check_branch
          %256 = sbr.rel (%p254) target = $region52
        $region51: #{tpu_custom_call.1} parent=47 // pred_region
          %257 = dma.done [#allocation5], 1536
        $region52: #{tpu_custom_call.1} parent=47 // pred_fallthru
          _
        %p258 = scmp.lt.s32.totalorder %s19, 1
        %s259 = scalar_select %p258, %s19, 1
        %s260 = smul.addr %s259, 8
        %s261 = smul.addr %s260, 8
        %s262 = scalar_lea.vmem %s0, %s261
        %p263 = pneg %p40
        %p264 = pneg %p37
        %p265 = pneg %p61
        %p266 = pneg %p58
        %p267 = pneg %p82
        %p268 = pneg %p79
        %p269 = pneg %p103
        %p270 = pneg %p100
        %p271 = pneg %p124
        %p272 = pneg %p121
        %p273 = pneg %p145
        %p274 = pneg %p142
        %p275 = pneg %p166
        %p276 = pneg %p163
        %p277 = pneg %p192
        %p278 = pneg %p189
        %p279 = scmp.lt.s32.totalorder %s19, 1
        %s280 = scalar_select %p279, %s19, 1
        %s281 = smul.addr %s280, 2
        %s282 = smul.addr %s281, 8
        %s283 = scalar_lea.vmem %s7, %s282
        %p284 = scmp.lt.s32.totalorder %s19, 1
        %s285 = scalar_select %p284, %s19, 1
        %s286 = smul.addr %s285, 8
        %s287 = smul.addr %s286, 8
        %s288 = scalar_lea.vmem %s0, %s287
        %p289 = scmp.lt.s32.totalorder %s19, 1
        %s290 = scalar_select %p289, %s19, 1
        %s291 = smul.addr %s290, 2
        %s292 = smul.addr %s291, 8
        %s293 = scalar_lea.vmem %s7, %s292
        %v294 = vld [vmem:[%s288] sm:$0xff]
        %v295 = vld [vmem:[%s288 + $0x8] sm:$0xff]
        %v296 = vld [vmem:[%s288 + $0x10] sm:$0xff]
        %v297 = vld [vmem:[%s288 + $0x18] sm:$0xff]
        %v298 = vld [vmem:[%s288 + $0x20] sm:$0xff]
        %v299 = vld [vmem:[%s288 + $0x28] sm:$0xff]
        %v300 = vld [vmem:[%s288 + $0x30] sm:$0xff]
        %v301 = vld [vmem:[%s288 + $0x38] sm:$0xff]
        %v302 = vld [vmem:[%s1] sm:$0xff]
        %v303 = vld [vmem:[%s2] sm:$0x1]
        %v305 = vlaneseq
        %v306 = vshrl.u32 %v305, 7
        %v307 = vsub.s32 0, %v306
        %v308 = vrot.slane %v303, %v307
        %vm310 = vcmask 64512
        %v312 = vsel %vm310, %v294, 0
        %v315 = vsel %vm310, %v295, 0
        %v318 = vsel %vm310, %v296, 0
        %v321 = vsel %vm310, %v297, 0
        %v324 = vsel %vm310, %v298, 0
        %v327 = vsel %vm310, %v299, 0
        %v330 = vsel %vm310, %v300, 0
        %v333 = vsel %vm310, %v301, 0
        %335 = vmatprep.subr.mxu0 0.0
        %336 = vmatpush1.msra.mxu0 %v302
        %337 = vmatprep.subr.mxu0 0.0
        %338 = vmatpush1.msra.mxu0 0.0
        %339 = vmatprep.subr.mxu0 0.0
        %340 = vmatpush1.msra.mxu0 0.0
        %341 = vmatprep.subr.mxu0 0.0
        %342 = vmatpush1.msra.mxu0 0.0
        %343 = vmatprep.subr.mxu0 0.0
        %344 = vmatpush1.msra.mxu0 0.0
        %345 = vmatprep.subr.mxu0 0.0
        %346 = vmatpush1.msra.mxu0 0.0
        %347 = vmatprep.subr.mxu0 0.0
        %348 = vmatpush1.msra.mxu0 0.0
        %349 = vmatprep.subr.mxu0 0.0
        %350 = vmatpush1.msra.mxu0 0.0
        %351 = vmatprep.subr.mxu0 0.0
        %352 = vmatpush1.msra.mxu0 0.0
        %353 = vmatprep.subr.mxu0 0.0
        %354 = vmatpush1.msra.mxu0 0.0
        %355 = vmatprep.subr.mxu0 0.0
        %356 = vmatpush1.msra.mxu0 0.0
        %357 = vmatprep.subr.mxu0 0.0
        %358 = vmatpush1.msra.mxu0 0.0
        %359 = vmatprep.subr.mxu0 0.0
        %360 = vmatpush1.msra.mxu0 0.0
        %361 = vmatprep.subr.mxu0 0.0
        %362 = vmatpush1.msra.mxu0 0.0
        %363 = vmatprep.subr.mxu0 0.0
        %364 = vmatpush1.msra.mxu0 0.0
        %365 = vmatprep.subr.mxu0 0.0
        %366 = vmatpush1.msra.mxu0 0.0
        %367 = vmatprep.subr.mxu0 0.0
        %368 = vmatpush1.msra.mxu0 0.0
        %369 = vmatprep.subr.mxu0 0.0
        %370 = vmatpush1.msra.mxu0 0.0
        %371 = vmatprep.subr.mxu0 0.0
        %372 = vmatpush1.msra.mxu0 0.0
        %373 = vmatprep.subr.mxu0 0.0
        %374 = vmatpush1.msra.mxu0 0.0
        %375 = vmatprep.subr.mxu0 0.0
        %376 = vmatpush1.msra.mxu0 0.0
        %377 = vmatprep.subr.mxu0 0.0
        %378 = vmatpush1.msra.mxu0 0.0
        %379 = vmatprep.subr.mxu0 0.0
        %380 = vmatpush1.msra.mxu0 0.0
        %381 = vmatprep.subr.mxu0 0.0
        %382 = vmatpush1.msra.mxu0 0.0
        %383 = vmatprep.subr.mxu0 0.0
        %384 = vmatpush1.msra.mxu0 0.0
        %385 = vmatprep.subr.mxu0 0.0
        %386 = vmatpush1.msra.mxu0 0.0
        %387 = vmatprep.subr.mxu0 0.0
        %388 = vmatpush1.msra.mxu0 0.0
        %389 = vmatprep.subr.mxu0 0.0
        %390 = vmatpush1.msra.mxu0 0.0
        %391 = vmatprep.subr.mxu0 0.0
        %392 = vmatpush1.msra.mxu0 0.0
        %393 = vmatprep.subr.mxu0 0.0
        %394 = vmatpush1.msra.mxu0 0.0
        %395 = vmatprep.subr.mxu0 0.0
        %396 = vmatpush1.msra.mxu0 0.0
        %397 = vmatprep.subr.mxu0 0.0
        %398 = vmatpush1.msra.mxu0 0.0
        %399 = vmatprep.mubr.f32.mxu0 0.0
        %400 = vmatmul.mubr.f32.gmra.mrb[0].mxu0 %v312
        %v401 = vpop.f32.mrb[0].mxu0
        %v402 = vadd.f32 %v308, %v401
        %v403 = vpop.f32.mrb[0].mxu0
        %404 = vmatprep.mubr.f32.mxu0 0.0
        %405 = vmatmul.mubr.f32.gmra.mrb[0].mxu0 %v315
        %v406 = vpop.f32.mrb[0].mxu0
        %v407 = vadd.f32 %v308, %v406
        %v408 = vpop.f32.mrb[0].mxu0
        %409 = vmatprep.mubr.f32.mxu0 0.0
        %410 = vmatmul.mubr.f32.gmra.mrb[0].mxu0 %v318
        %v411 = vpop.f32.mrb[0].mxu0
        %v412 = vadd.f32 %v308, %v411
        %v413 = vpop.f32.mrb[0].mxu0
        %414 = vmatprep.mubr.f32.mxu0 0.0
        %415 = vmatmul.mubr.f32.gmra.mrb[0].mxu0 %v321
        %v416 = vpop.f32.mrb[0].mxu0
        %v417 = vadd.f32 %v308, %v416
        %v418 = vpop.f32.mrb[0].mxu0
        %419 = vmatprep.mubr.f32.mxu0 0.0
        %420 = vmatmul.mubr.f32.gmra.mrb[0].mxu0 %v324
        %v421 = vpop.f32.mrb[0].mxu0
        %v422 = vadd.f32 %v308, %v421
        %v423 = vpop.f32.mrb[0].mxu0
        %424 = vmatprep.mubr.f32.mxu0 0.0
        %425 = vmatmul.mubr.f32.gmra.mrb[0].mxu0 %v327
        %v426 = vpop.f32.mrb[0].mxu0
        %v427 = vadd.f32 %v308, %v426
        %v428 = vpop.f32.mrb[0].mxu0
        %429 = vmatprep.mubr.f32.mxu0 0.0
        %430 = vmatmul.mubr.f32.gmra.mrb[0].mxu0 %v330
        %v431 = vpop.f32.mrb[0].mxu0
        %v432 = vadd.f32 %v308, %v431
        %v433 = vpop.f32.mrb[0].mxu0
        %434 = vmatprep.mubr.f32.mxu0 0.0
        %435 = vmatmul.mubr.f32.gmra.mrb[0].mxu0 %v333
        %v436 = vpop.f32.mrb[0].mxu0
        %v437 = vadd.f32 %v308, %v436
        %v438 = vpop.f32.mrb[0].mxu0
        %439 = vdwg.mxu0
        %vm440 = vcmask 261120
        %441 = vst.msk [vmem:[#allocation2] sm:$0xff] %vm440, %v402
        %442 = vst.msk [vmem:[#allocation2 + $0x8] sm:$0xff] %vm440, %v407
        %443 = vst.msk [vmem:[#allocation2 + $0x10] sm:$0xff] %vm440, %v412
        %444 = vst.msk [vmem:[#allocation2 + $0x18] sm:$0xff] %vm440, %v417
        %445 = vst.msk [vmem:[#allocation2 + $0x20] sm:$0xff] %vm440, %v422
        %446 = vst.msk [vmem:[#allocation2 + $0x28] sm:$0xff] %vm440, %v427
        %447 = vst.msk [vmem:[#allocation2 + $0x30] sm:$0xff] %vm440, %v432
        %448 = vst.msk [vmem:[#allocation2 + $0x38] sm:$0xff] %vm440, %v437
        %v449 = vld [vmem:[#allocation2] ss:$2 sm:$0xff]
        %s450 = scalar_lea.vmem [#allocation2], 16
        %v451 = vld [vmem:[%s450] ss:$2 sm:$0xff]
        %s452 = scalar_lea.vmem [#allocation2], 32
        %v453 = vld [vmem:[%s452] ss:$2 sm:$0xff]
        %s454 = scalar_lea.vmem [#allocation2], 48
        %v455 = vld [vmem:[%s454] ss:$2 sm:$0x7f]
        %v456 = vld [vmem:[%s3] sm:$0xff]
        %v457 = vld [vmem:[%s3 + $0x8] sm:$0xff]
        %v458 = vld [vmem:[%s3 + $0x10] sm:$0xff]
        %v459 = vld [vmem:[%s3 + $0x18] sm:$0xff]
        %s460 = scalar_lea.vmem [#allocation2], 1
        %v461 = vld [vmem:[%s460] ss:$2 sm:$0xff]
        %s462 = scalar_lea.vmem [#allocation2], 17
        %v463 = vld [vmem:[%s462] ss:$2 sm:$0xff]
        %s464 = scalar_lea.vmem [#allocation2], 33
        %v465 = vld [vmem:[%s464] ss:$2 sm:$0xff]
        %s466 = scalar_lea.vmem [#allocation2], 49
        %v467 = vld [vmem:[%s466] ss:$2 sm:$0x7f]
        %s468 = scalar_lea.vmem %s3, 32
        %v469 = vld [vmem:[%s468] sm:$0xff]
        %v470 = vld [vmem:[%s468 + $0x8] sm:$0xff]
        %v471 = vld [vmem:[%s468 + $0x10] sm:$0xff]
        %v472 = vld [vmem:[%s468 + $0x18] sm:$0xff]
        %v474 = vsel %vm440, %v461, 0
        %v477 = vsel %vm440, %v463, 0
        %v480 = vsel %vm440, %v465, 0
        %v483 = vsel %vm440, %v467, 0
        %485 = vmatprep.subr.mxu0 0.0
        %486 = vmatpush1.msra.mxu0 %v469
        %487 = vmatprep.subr.mxu0 0.0
        %488 = vmatpush1.msra.mxu0 %v470
        %489 = vmatprep.subr.mxu0 0.0
        %490 = vmatpush1.msra.mxu0 %v471
        %491 = vmatprep.subr.mxu0 0.0
        %492 = vmatpush1.msra.mxu0 %v472
        %493 = vmatprep.subr.mxu0 0.0
        %494 = vmatpush1.msra.mxu0 0.0
        %495 = vmatprep.subr.mxu0 0.0
        %496 = vmatpush1.msra.mxu0 0.0
        %497 = vmatprep.subr.mxu0 0.0
        %498 = vmatpush1.msra.mxu0 0.0
        %499 = vmatprep.subr.mxu0 0.0
        %500 = vmatpush1.msra.mxu0 0.0
        %501 = vmatprep.subr.mxu0 0.0
        %502 = vmatpush1.msra.mxu0 0.0
        %503 = vmatprep.subr.mxu0 0.0
        %504 = vmatpush1.msra.mxu0 0.0
        %505 = vmatprep.subr.mxu0 0.0
        %506 = vmatpush1.msra.mxu0 0.0
        %507 = vmatprep.subr.mxu0 0.0
        %508 = vmatpush1.msra.mxu0 0.0
        %509 = vmatprep.subr.mxu0 0.0
        %510 = vmatpush1.msra.mxu0 0.0
        %511 = vmatprep.subr.mxu0 0.0
        %512 = vmatpush1.msra.mxu0 0.0
        %513 = vmatprep.subr.mxu0 0.0
        %514 = vmatpush1.msra.mxu0 0.0
        %515 = vmatprep.subr.mxu0 0.0
        %516 = vmatpush1.msra.mxu0 0.0
        %517 = vmatprep.subr.mxu0 0.0
        %518 = vmatpush1.msra.mxu0 0.0
        %519 = vmatprep.subr.mxu0 0.0
        %520 = vmatpush1.msra.mxu0 0.0
        %521 = vmatprep.subr.mxu0 0.0
        %522 = vmatpush1.msra.mxu0 0.0
        %523 = vmatprep.subr.mxu0 0.0
        %524 = vmatpush1.msra.mxu0 0.0
        %525 = vmatprep.subr.mxu0 0.0
        %526 = vmatpush1.msra.mxu0 0.0
        %527 = vmatprep.subr.mxu0 0.0
        %528 = vmatpush1.msra.mxu0 0.0
        %529 = vmatprep.subr.mxu0 0.0
        %530 = vmatpush1.msra.mxu0 0.0
        %531 = vmatprep.subr.mxu0 0.0
        %532 = vmatpush1.msra.mxu0 0.0
        %533 = vmatprep.subr.mxu0 0.0
        %534 = vmatpush1.msra.mxu0 0.0
        %535 = vmatprep.subr.mxu0 0.0
        %536 = vmatpush1.msra.mxu0 0.0
        %537 = vmatprep.subr.mxu0 0.0
        %538 = vmatpush1.msra.mxu0 0.0
        %539 = vmatprep.subr.mxu0 0.0
        %540 = vmatpush1.msra.mxu0 0.0
        %541 = vmatprep.subr.mxu0 0.0
        %542 = vmatpush1.msra.mxu0 0.0
        %543 = vmatprep.subr.mxu0 0.0
        %544 = vmatpush1.msra.mxu0 0.0
        %545 = vmatprep.subr.mxu0 0.0
        %546 = vmatpush1.msra.mxu0 0.0
        %547 = vmatprep.subr.mxu0 0.0
        %548 = vmatpush1.msra.mxu0 0.0
        %549 = vmatprep.mubr.f32.mxu0 0.0
        %550 = vmatmul.mubr.f32.gmra.mrb[0].mxu0 %v474
        %v551 = vpop.f32.mrb[0].mxu0
        %v552 = vadd.f32 0.0, %v551
        %v553 = vpop.f32.mrb[0].mxu0
        %554 = vmatprep.mubr.f32.mxu0 0.0
        %555 = vmatmul.mubr.f32.gmra.mrb[0].mxu0 %v477
        %v556 = vpop.f32.mrb[0].mxu0
        %v557 = vadd.f32 0.0, %v556
        %v558 = vpop.f32.mrb[0].mxu0
        %559 = vmatprep.mubr.f32.mxu0 0.0
        %560 = vmatmul.mubr.f32.gmra.mrb[0].mxu0 %v480
        %v561 = vpop.f32.mrb[0].mxu0
        %v562 = vadd.f32 0.0, %v561
        %v563 = vpop.f32.mrb[0].mxu0
        %564 = vmatprep.mubr.f32.mxu0 0.0
        %565 = vmatmul.mubr.f32.gmra.mrb[0].mxu0 %v483
        %v566 = vpop.f32.mrb[0].mxu0
        %v567 = vadd.f32 0.0, %v566
        %v568 = vpop.f32.mrb[0].mxu0
        %569 = vdwg.mxu0
        %v571 = vsel %vm440, %v449, 0
        %v574 = vsel %vm440, %v451, 0
        %v577 = vsel %vm440, %v453, 0
        %v580 = vsel %vm440, %v455, 0
        %582 = vmatprep.subr.mxu0 0.0
        %583 = vmatpush1.msra.mxu0 %v456
        %584 = vmatprep.subr.mxu0 0.0
        %585 = vmatpush1.msra.mxu0 %v457
        %586 = vmatprep.subr.mxu0 0.0
        %587 = vmatpush1.msra.mxu0 %v458
        %588 = vmatprep.subr.mxu0 0.0
        %589 = vmatpush1.msra.mxu0 %v459
        %590 = vmatprep.subr.mxu0 0.0
        %591 = vmatpush1.msra.mxu0 0.0
        %592 = vmatprep.subr.mxu0 0.0
        %593 = vmatpush1.msra.mxu0 0.0
        %594 = vmatprep.subr.mxu0 0.0
        %595 = vmatpush1.msra.mxu0 0.0
        %596 = vmatprep.subr.mxu0 0.0
        %597 = vmatpush1.msra.mxu0 0.0
        %598 = vmatprep.subr.mxu0 0.0
        %599 = vmatpush1.msra.mxu0 0.0
        %600 = vmatprep.subr.mxu0 0.0
        %601 = vmatpush1.msra.mxu0 0.0
        %602 = vmatprep.subr.mxu0 0.0
        %603 = vmatpush1.msra.mxu0 0.0
        %604 = vmatprep.subr.mxu0 0.0
        %605 = vmatpush1.msra.mxu0 0.0
        %606 = vmatprep.subr.mxu0 0.0
        %607 = vmatpush1.msra.mxu0 0.0
        %608 = vmatprep.subr.mxu0 0.0
        %609 = vmatpush1.msra.mxu0 0.0
        %610 = vmatprep.subr.mxu0 0.0
        %611 = vmatpush1.msra.mxu0 0.0
        %612 = vmatprep.subr.mxu0 0.0
        %613 = vmatpush1.msra.mxu0 0.0
        %614 = vmatprep.subr.mxu0 0.0
        %615 = vmatpush1.msra.mxu0 0.0
        %616 = vmatprep.subr.mxu0 0.0
        %617 = vmatpush1.msra.mxu0 0.0
        %618 = vmatprep.subr.mxu0 0.0
        %619 = vmatpush1.msra.mxu0 0.0
        %620 = vmatprep.subr.mxu0 0.0
        %621 = vmatpush1.msra.mxu0 0.0
        %622 = vmatprep.subr.mxu0 0.0
        %623 = vmatpush1.msra.mxu0 0.0
        %624 = vmatprep.subr.mxu0 0.0
        %625 = vmatpush1.msra.mxu0 0.0
        %626 = vmatprep.subr.mxu0 0.0
        %627 = vmatpush1.msra.mxu0 0.0
        %628 = vmatprep.subr.mxu0 0.0
        %629 = vmatpush1.msra.mxu0 0.0
        %630 = vmatprep.subr.mxu0 0.0
        %631 = vmatpush1.msra.mxu0 0.0
        %632 = vmatprep.subr.mxu0 0.0
        %633 = vmatpush1.msra.mxu0 0.0
        %634 = vmatprep.subr.mxu0 0.0
        %635 = vmatpush1.msra.mxu0 0.0
        %636 = vmatprep.subr.mxu0 0.0
        %637 = vmatpush1.msra.mxu0 0.0
        %638 = vmatprep.subr.mxu0 0.0
        %639 = vmatpush1.msra.mxu0 0.0
        %640 = vmatprep.subr.mxu0 0.0
        %641 = vmatpush1.msra.mxu0 0.0
        %642 = vmatprep.subr.mxu0 0.0
        %643 = vmatpush1.msra.mxu0 0.0
        %644 = vmatprep.subr.mxu0 0.0
        %645 = vmatpush1.msra.mxu0 0.0
        %646 = vmatprep.mubr.f32.mxu0 0.0
        %647 = vmatmul.mubr.f32.gmra.mrb[0].mxu0 %v571
        %v648 = vpop.f32.mrb[0].mxu0
        %v649 = vadd.f32 %v552, %v648
        %v650 = vpop.f32.mrb[0].mxu0
        %651 = vmatprep.mubr.f32.mxu0 0.0
        %652 = vmatmul.mubr.f32.gmra.mrb[0].mxu0 %v574
        %v653 = vpop.f32.mrb[0].mxu0
        %v654 = vadd.f32 %v557, %v653
        %v655 = vpop.f32.mrb[0].mxu0
        %656 = vmatprep.mubr.f32.mxu0 0.0
        %657 = vmatmul.mubr.f32.gmra.mrb[0].mxu0 %v577
        %v658 = vpop.f32.mrb[0].mxu0
        %v659 = vadd.f32 %v562, %v658
        %v660 = vpop.f32.mrb[0].mxu0
        %661 = vmatprep.mubr.f32.mxu0 0.0
        %662 = vmatmul.mubr.f32.gmra.mrb[0].mxu0 %v580
        %v663 = vpop.f32.mrb[0].mxu0
        %v664 = vadd.f32 %v567, %v663
        %v665 = vpop.f32.mrb[0].mxu0
        %666 = vdwg.mxu0
        %s667 = scalar_lea.vmem [#allocation2], 2
        %v668 = vld [vmem:[%s667] ss:$2 sm:$0xff]
        %s669 = scalar_lea.vmem [#allocation2], 18
        %v670 = vld [vmem:[%s669] ss:$2 sm:$0xff]
        %s671 = scalar_lea.vmem [#allocation2], 34
        %v672 = vld [vmem:[%s671] ss:$2 sm:$0xff]
        %s673 = scalar_lea.vmem [#allocation2], 50
        %v674 = vld [vmem:[%s673] ss:$2 sm:$0x7f]
        %s675 = scalar_lea.vmem %s3, 64
        %v676 = vld [vmem:[%s675] sm:$0xff]
        %v677 = vld [vmem:[%s675 + $0x8] sm:$0xff]
        %v678 = vld [vmem:[%s675 + $0x10] sm:$0xff]
        %v679 = vld [vmem:[%s675 + $0x18] sm:$0xff]
        %v681 = vsel %vm440, %v668, 0
        %v684 = vsel %vm440, %v670, 0
        %v687 = vsel %vm440, %v672, 0
        %v690 = vsel %vm440, %v674, 0
        %692 = vmatprep.subr.mxu0 0.0
        %693 = vmatpush1.msra.mxu0 %v676
        %694 = vmatprep.subr.mxu0 0.0
        %695 = vmatpush1.msra.mxu0 %v677
        %696 = vmatprep.subr.mxu0 0.0
        %697 = vmatpush1.msra.mxu0 %v678
        %698 = vmatprep.subr.mxu0 0.0
        %699 = vmatpush1.msra.mxu0 %v679
        %700 = vmatprep.subr.mxu0 0.0
        %701 = vmatpush1.msra.mxu0 0.0
        %702 = vmatprep.subr.mxu0 0.0
        %703 = vmatpush1.msra.mxu0 0.0
        %704 = vmatprep.subr.mxu0 0.0
        %705 = vmatpush1.msra.mxu0 0.0
        %706 = vmatprep.subr.mxu0 0.0
        %707 = vmatpush1.msra.mxu0 0.0
        %708 = vmatprep.subr.mxu0 0.0
        %709 = vmatpush1.msra.mxu0 0.0
        %710 = vmatprep.subr.mxu0 0.0
        %711 = vmatpush1.msra.mxu0 0.0
        %712 = vmatprep.subr.mxu0 0.0
        %713 = vmatpush1.msra.mxu0 0.0
        %714 = vmatprep.subr.mxu0 0.0
        %715 = vmatpush1.msra.mxu0 0.0
        %716 = vmatprep.subr.mxu0 0.0
        %717 = vmatpush1.msra.mxu0 0.0
        %718 = vmatprep.subr.mxu0 0.0
        %719 = vmatpush1.msra.mxu0 0.0
        %720 = vmatprep.subr.mxu0 0.0
        %721 = vmatpush1.msra.mxu0 0.0
        %722 = vmatprep.subr.mxu0 0.0
        %723 = vmatpush1.msra.mxu0 0.0
        %724 = vmatprep.subr.mxu0 0.0
        %725 = vmatpush1.msra.mxu0 0.0
        %726 = vmatprep.subr.mxu0 0.0
        %727 = vmatpush1.msra.mxu0 0.0
        %728 = vmatprep.subr.mxu0 0.0
        %729 = vmatpush1.msra.mxu0 0.0
        %730 = vmatprep.subr.mxu0 0.0
        %731 = vmatpush1.msra.mxu0 0.0
        %732 = vmatprep.subr.mxu0 0.0
        %733 = vmatpush1.msra.mxu0 0.0
        %734 = vmatprep.subr.mxu0 0.0
        %735 = vmatpush1.msra.mxu0 0.0
        %736 = vmatprep.subr.mxu0 0.0
        %737 = vmatpush1.msra.mxu0 0.0
        %738 = vmatprep.subr.mxu0 0.0
        %739 = vmatpush1.msra.mxu0 0.0
        %740 = vmatprep.subr.mxu0 0.0
        %741 = vmatpush1.msra.mxu0 0.0
        %742 = vmatprep.subr.mxu0 0.0
        %743 = vmatpush1.msra.mxu0 0.0
        %744 = vmatprep.subr.mxu0 0.0
        %745 = vmatpush1.msra.mxu0 0.0
        %746 = vmatprep.subr.mxu0 0.0
        %747 = vmatpush1.msra.mxu0 0.0
        %748 = vmatprep.subr.mxu0 0.0
        %749 = vmatpush1.msra.mxu0 0.0
        %750 = vmatprep.subr.mxu0 0.0
        %751 = vmatpush1.msra.mxu0 0.0
        %752 = vmatprep.subr.mxu0 0.0
        %753 = vmatpush1.msra.mxu0 0.0
        %754 = vmatprep.subr.mxu0 0.0
        %755 = vmatpush1.msra.mxu0 0.0
        %756 = vmatprep.mubr.f32.mxu0 0.0
        %757 = vmatmul.mubr.f32.gmra.mrb[0].mxu0 %v681
        %v758 = vpop.f32.mrb[0].mxu0
        %v759 = vadd.f32 0.0, %v758
        %v760 = vpop.f32.mrb[0].mxu0
        %761 = vmatprep.mubr.f32.mxu0 0.0
        %762 = vmatmul.mubr.f32.gmra.mrb[0].mxu0 %v684
        %v763 = vpop.f32.mrb[0].mxu0
        %v764 = vadd.f32 0.0, %v763
        %v765 = vpop.f32.mrb[0].mxu0
        %766 = vmatprep.mubr.f32.mxu0 0.0
        %767 = vmatmul.mubr.f32.gmra.mrb[0].mxu0 %v687
        %v768 = vpop.f32.mrb[0].mxu0
        %v769 = vadd.f32 0.0, %v768
        %v770 = vpop.f32.mrb[0].mxu0
        %771 = vmatprep.mubr.f32.mxu0 0.0
        %772 = vmatmul.mubr.f32.gmra.mrb[0].mxu0 %v690
        %v773 = vpop.f32.mrb[0].mxu0
        %v774 = vadd.f32 0.0, %v773
        %v775 = vpop.f32.mrb[0].mxu0
        %776 = vdwg.mxu0
        %v777 = vadd.f32 %v649, %v759
        %v778 = vadd.f32 %v654, %v764
        %v779 = vadd.f32 %v659, %v769
        %v780 = vadd.f32 %v664, %v774
        %v781 = vld [vmem:[%s4] sm:$0x1]
        %v783 = vlaneseq
        %v784 = vshrl.u32 %v783, 7
        %v785 = vsub.s32 0, %v784
        %v786 = vrot.slane %v781, %v785
        %v788 = vadd.f32 %v777, %v786
        %v789 = vadd.f32 %v778, %v786
        %v790 = vadd.f32 %v779, %v786
        %v791 = vadd.f32 %v780, %v786
        %v792 = vmax.f32 %v788, 0.0
        %v793 = vmax.f32 %v789, 0.0
        %v794 = vmax.f32 %v790, 0.0
        %v795 = vmax.f32 %v791, 0.0
        %796 = vst.msk [vmem:[#allocation3] sm:$0xff] %vm440, %v792
        %797 = vst.msk [vmem:[#allocation3 + $0x8] sm:$0xff] %vm440, %v793
        %798 = vst.msk [vmem:[#allocation3 + $0x10] sm:$0xff] %vm440, %v794
        %vm799 = vcmask 260096
        %800 = vst.msk [vmem:[#allocation3 + $0x18] sm:$0x7f] %vm799, %v795
        %v801 = vld [vmem:[#allocation3] ss:$2 sm:$0xff]
        %s802 = scalar_lea.vmem [#allocation3], 16
        %v803 = vld [vmem:[%s802] ss:$2 sm:$0x7f]
        %v804 = vld [vmem:[#allocation4] sm:$0xff]
        %v805 = vld [vmem:[#allocation4 + $0x8] sm:$0xff]
        %v806 = vld [vmem:[#allocation4 + $0x10] sm:$0xff]
        %v807 = vld [vmem:[#allocation4 + $0x18] sm:$0xff]
        %s808 = scalar_lea.vmem [#allocation3], 1
        %v809 = vld [vmem:[%s808] ss:$2 sm:$0xff]
        %s810 = scalar_lea.vmem [#allocation3], 17
        %v811 = vld [vmem:[%s810] ss:$2 sm:$0x7f]
        %s812 = scalar_lea.vmem [#allocation4], 32
        %v813 = vld [vmem:[%s812] sm:$0xff]
        %v814 = vld [vmem:[%s812 + $0x8] sm:$0xff]
        %v815 = vld [vmem:[%s812 + $0x10] sm:$0xff]
        %v816 = vld [vmem:[%s812 + $0x18] sm:$0xff]
        %v818 = vsel %vm440, %v809, 0
        %v821 = vsel %vm440, %v811, 0
        %823 = vmatprep.subr.mxu0 0.0
        %824 = vmatpush1.msra.mxu0 %v813
        %825 = vmatprep.subr.mxu0 0.0
        %826 = vmatpush1.msra.mxu0 %v814
        %827 = vmatprep.subr.mxu0 0.0
        %828 = vmatpush1.msra.mxu0 %v815
        %829 = vmatprep.subr.mxu0 0.0
        %830 = vmatpush1.msra.mxu0 %v816
        %831 = vmatprep.subr.mxu0 0.0
        %832 = vmatpush1.msra.mxu0 0.0
        %833 = vmatprep.subr.mxu0 0.0
        %834 = vmatpush1.msra.mxu0 0.0
        %835 = vmatprep.subr.mxu0 0.0
        %836 = vmatpush1.msra.mxu0 0.0
        %837 = vmatprep.subr.mxu0 0.0
        %838 = vmatpush1.msra.mxu0 0.0
        %839 = vmatprep.subr.mxu0 0.0
        %840 = vmatpush1.msra.mxu0 0.0
        %841 = vmatprep.subr.mxu0 0.0
        %842 = vmatpush1.msra.mxu0 0.0
        %843 = vmatprep.subr.mxu0 0.0
        %844 = vmatpush1.msra.mxu0 0.0
        %845 = vmatprep.subr.mxu0 0.0
        %846 = vmatpush1.msra.mxu0 0.0
        %847 = vmatprep.subr.mxu0 0.0
        %848 = vmatpush1.msra.mxu0 0.0
        %849 = vmatprep.subr.mxu0 0.0
        %850 = vmatpush1.msra.mxu0 0.0
        %851 = vmatprep.subr.mxu0 0.0
        %852 = vmatpush1.msra.mxu0 0.0
        %853 = vmatprep.subr.mxu0 0.0
        %854 = vmatpush1.msra.mxu0 0.0
        %855 = vmatprep.subr.mxu0 0.0
        %856 = vmatpush1.msra.mxu0 0.0
        %857 = vmatprep.subr.mxu0 0.0
        %858 = vmatpush1.msra.mxu0 0.0
        %859 = vmatprep.subr.mxu0 0.0
        %860 = vmatpush1.msra.mxu0 0.0
        %861 = vmatprep.subr.mxu0 0.0
        %862 = vmatpush1.msra.mxu0 0.0
        %863 = vmatprep.subr.mxu0 0.0
        %864 = vmatpush1.msra.mxu0 0.0
        %865 = vmatprep.subr.mxu0 0.0
        %866 = vmatpush1.msra.mxu0 0.0
        %867 = vmatprep.subr.mxu0 0.0
        %868 = vmatpush1.msra.mxu0 0.0
        %869 = vmatprep.subr.mxu0 0.0
        %870 = vmatpush1.msra.mxu0 0.0
        %871 = vmatprep.subr.mxu0 0.0
        %872 = vmatpush1.msra.mxu0 0.0
        %873 = vmatprep.subr.mxu0 0.0
        %874 = vmatpush1.msra.mxu0 0.0
        %875 = vmatprep.subr.mxu0 0.0
        %876 = vmatpush1.msra.mxu0 0.0
        %877 = vmatprep.subr.mxu0 0.0
        %878 = vmatpush1.msra.mxu0 0.0
        %879 = vmatprep.subr.mxu0 0.0
        %880 = vmatpush1.msra.mxu0 0.0
        %881 = vmatprep.subr.mxu0 0.0
        %882 = vmatpush1.msra.mxu0 0.0
        %883 = vmatprep.subr.mxu0 0.0
        %884 = vmatpush1.msra.mxu0 0.0
        %885 = vmatprep.subr.mxu0 0.0
        %886 = vmatpush1.msra.mxu0 0.0
        %887 = vmatprep.mubr.f32.mxu0 0.0
        %888 = vmatmul.mubr.f32.gmra.mrb[0].mxu0 %v818
        %v889 = vpop.f32.mrb[0].mxu0
        %v890 = vadd.f32 0.0, %v889
        %v891 = vpop.f32.mrb[0].mxu0
        %892 = vmatprep.mubr.f32.mxu0 0.0
        %893 = vmatmul.mubr.f32.gmra.mrb[0].mxu0 %v821
        %v894 = vpop.f32.mrb[0].mxu0
        %v895 = vadd.f32 0.0, %v894
        %v896 = vpop.f32.mrb[0].mxu0
        %897 = vdwg.mxu0
        %v899 = vsel %vm440, %v801, 0
        %v902 = vsel %vm440, %v803, 0
        %904 = vmatprep.subr.mxu0 0.0
        %905 = vmatpush1.msra.mxu0 %v804
        %906 = vmatprep.subr.mxu0 0.0
        %907 = vmatpush1.msra.mxu0 %v805
        %908 = vmatprep.subr.mxu0 0.0
        %909 = vmatpush1.msra.mxu0 %v806
        %910 = vmatprep.subr.mxu0 0.0
        %911 = vmatpush1.msra.mxu0 %v807
        %912 = vmatprep.subr.mxu0 0.0
        %913 = vmatpush1.msra.mxu0 0.0
        %914 = vmatprep.subr.mxu0 0.0
        %915 = vmatpush1.msra.mxu0 0.0
        %916 = vmatprep.subr.mxu0 0.0
        %917 = vmatpush1.msra.mxu0 0.0
        %918 = vmatprep.subr.mxu0 0.0
        %919 = vmatpush1.msra.mxu0 0.0
        %920 = vmatprep.subr.mxu0 0.0
        %921 = vmatpush1.msra.mxu0 0.0
        %922 = vmatprep.subr.mxu0 0.0
        %923 = vmatpush1.msra.mxu0 0.0
        %924 = vmatprep.subr.mxu0 0.0
        %925 = vmatpush1.msra.mxu0 0.0
        %926 = vmatprep.subr.mxu0 0.0
        %927 = vmatpush1.msra.mxu0 0.0
        %928 = vmatprep.subr.mxu0 0.0
        %929 = vmatpush1.msra.mxu0 0.0
        %930 = vmatprep.subr.mxu0 0.0
        %931 = vmatpush1.msra.mxu0 0.0
        %932 = vmatprep.subr.mxu0 0.0
        %933 = vmatpush1.msra.mxu0 0.0
        %934 = vmatprep.subr.mxu0 0.0
        %935 = vmatpush1.msra.mxu0 0.0
        %936 = vmatprep.subr.mxu0 0.0
        %937 = vmatpush1.msra.mxu0 0.0
        %938 = vmatprep.subr.mxu0 0.0
        %939 = vmatpush1.msra.mxu0 0.0
        %940 = vmatprep.subr.mxu0 0.0
        %941 = vmatpush1.msra.mxu0 0.0
        %942 = vmatprep.subr.mxu0 0.0
        %943 = vmatpush1.msra.mxu0 0.0
        %944 = vmatprep.subr.mxu0 0.0
        %945 = vmatpush1.msra.mxu0 0.0
        %946 = vmatprep.subr.mxu0 0.0
        %947 = vmatpush1.msra.mxu0 0.0
        %948 = vmatprep.subr.mxu0 0.0
        %949 = vmatpush1.msra.mxu0 0.0
        %950 = vmatprep.subr.mxu0 0.0
        %951 = vmatpush1.msra.mxu0 0.0
        %952 = vmatprep.subr.mxu0 0.0
        %953 = vmatpush1.msra.mxu0 0.0
        %954 = vmatprep.subr.mxu0 0.0
        %955 = vmatpush1.msra.mxu0 0.0
        %956 = vmatprep.subr.mxu0 0.0
        %957 = vmatpush1.msra.mxu0 0.0
        %958 = vmatprep.subr.mxu0 0.0
        %959 = vmatpush1.msra.mxu0 0.0
        %960 = vmatprep.subr.mxu0 0.0
        %961 = vmatpush1.msra.mxu0 0.0
        %962 = vmatprep.subr.mxu0 0.0
        %963 = vmatpush1.msra.mxu0 0.0
        %964 = vmatprep.subr.mxu0 0.0
        %965 = vmatpush1.msra.mxu0 0.0
        %966 = vmatprep.subr.mxu0 0.0
        %967 = vmatpush1.msra.mxu0 0.0
        %968 = vmatprep.mubr.f32.mxu0 0.0
        %969 = vmatmul.mubr.f32.gmra.mrb[0].mxu0 %v899
        %v970 = vpop.f32.mrb[0].mxu0
        %v971 = vadd.f32 %v890, %v970
        %v972 = vpop.f32.mrb[0].mxu0
        %973 = vmatprep.mubr.f32.mxu0 0.0
        %974 = vmatmul.mubr.f32.gmra.mrb[0].mxu0 %v902
        %v975 = vpop.f32.mrb[0].mxu0
        %v976 = vadd.f32 %v895, %v975
        %v977 = vpop.f32.mrb[0].mxu0
        %978 = vdwg.mxu0
        %s979 = scalar_lea.vmem [#allocation3], 2
        %v980 = vld [vmem:[%s979] ss:$2 sm:$0xff]
        %s981 = scalar_lea.vmem [#allocation3], 18
        %v982 = vld [vmem:[%s981] ss:$2 sm:$0x7f]
        %s983 = scalar_lea.vmem [#allocation4], 64
        %v984 = vld [vmem:[%s983] sm:$0xff]
        %v985 = vld [vmem:[%s983 + $0x8] sm:$0xff]
        %v986 = vld [vmem:[%s983 + $0x10] sm:$0xff]
        %v987 = vld [vmem:[%s983 + $0x18] sm:$0xff]
        %v989 = vsel %vm440, %v980, 0
        %v992 = vsel %vm440, %v982, 0
        %994 = vmatprep.subr.mxu0 0.0
        %995 = vmatpush1.msra.mxu0 %v984
        %996 = vmatprep.subr.mxu0 0.0
        %997 = vmatpush1.msra.mxu0 %v985
        %998 = vmatprep.subr.mxu0 0.0
        %999 = vmatpush1.msra.mxu0 %v986
        %1000 = vmatprep.subr.mxu0 0.0
        %1001 = vmatpush1.msra.mxu0 %v987
        %1002 = vmatprep.subr.mxu0 0.0
        %1003 = vmatpush1.msra.mxu0 0.0
        %1004 = vmatprep.subr.mxu0 0.0
        %1005 = vmatpush1.msra.mxu0 0.0
        %1006 = vmatprep.subr.mxu0 0.0
        %1007 = vmatpush1.msra.mxu0 0.0
        %1008 = vmatprep.subr.mxu0 0.0
        %1009 = vmatpush1.msra.mxu0 0.0
        %1010 = vmatprep.subr.mxu0 0.0
        %1011 = vmatpush1.msra.mxu0 0.0
        %1012 = vmatprep.subr.mxu0 0.0
        %1013 = vmatpush1.msra.mxu0 0.0
        %1014 = vmatprep.subr.mxu0 0.0
        %1015 = vmatpush1.msra.mxu0 0.0
        %1016 = vmatprep.subr.mxu0 0.0
        %1017 = vmatpush1.msra.mxu0 0.0
        %1018 = vmatprep.subr.mxu0 0.0
        %1019 = vmatpush1.msra.mxu0 0.0
        %1020 = vmatprep.subr.mxu0 0.0
        %1021 = vmatpush1.msra.mxu0 0.0
        %1022 = vmatprep.subr.mxu0 0.0
        %1023 = vmatpush1.msra.mxu0 0.0
        %1024 = vmatprep.subr.mxu0 0.0
        %1025 = vmatpush1.msra.mxu0 0.0
        %1026 = vmatprep.subr.mxu0 0.0
        %1027 = vmatpush1.msra.mxu0 0.0
        %1028 = vmatprep.subr.mxu0 0.0
        %1029 = vmatpush1.msra.mxu0 0.0
        %1030 = vmatprep.subr.mxu0 0.0
        %1031 = vmatpush1.msra.mxu0 0.0
        %1032 = vmatprep.subr.mxu0 0.0
        %1033 = vmatpush1.msra.mxu0 0.0
        %1034 = vmatprep.subr.mxu0 0.0
        %1035 = vmatpush1.msra.mxu0 0.0
        %1036 = vmatprep.subr.mxu0 0.0
        %1037 = vmatpush1.msra.mxu0 0.0
        %1038 = vmatprep.subr.mxu0 0.0
        %1039 = vmatpush1.msra.mxu0 0.0
        %1040 = vmatprep.subr.mxu0 0.0
        %1041 = vmatpush1.msra.mxu0 0.0
        %1042 = vmatprep.subr.mxu0 0.0
        %1043 = vmatpush1.msra.mxu0 0.0
        %1044 = vmatprep.subr.mxu0 0.0
        %1045 = vmatpush1.msra.mxu0 0.0
        %1046 = vmatprep.subr.mxu0 0.0
        %1047 = vmatpush1.msra.mxu0 0.0
        %1048 = vmatprep.subr.mxu0 0.0
        %1049 = vmatpush1.msra.mxu0 0.0
        %1050 = vmatprep.subr.mxu0 0.0
        %1051 = vmatpush1.msra.mxu0 0.0
        %1052 = vmatprep.subr.mxu0 0.0
        %1053 = vmatpush1.msra.mxu0 0.0
        %1054 = vmatprep.subr.mxu0 0.0
        %1055 = vmatpush1.msra.mxu0 0.0
        %1056 = vmatprep.subr.mxu0 0.0
        %1057 = vmatpush1.msra.mxu0 0.0
        %1058 = vmatprep.mubr.f32.mxu0 0.0
        %1059 = vmatmul.mubr.f32.gmra.mrb[0].mxu0 %v989
        %v1060 = vpop.f32.mrb[0].mxu0
        %v1061 = vadd.f32 0.0, %v1060
        %v1062 = vpop.f32.mrb[0].mxu0
        %1063 = vmatprep.mubr.f32.mxu0 0.0
        %1064 = vmatmul.mubr.f32.gmra.mrb[0].mxu0 %v992
        %v1065 = vpop.f32.mrb[0].mxu0
        %v1066 = vadd.f32 0.0, %v1065
        %v1067 = vpop.f32.mrb[0].mxu0
        %1068 = vdwg.mxu0
        %v1069 = vadd.f32 %v971, %v1061
        %v1070 = vadd.f32 %v976, %v1066
        %v1071 = vld [vmem:[%s6] sm:$0x1]
        %v1073 = vlaneseq
        %v1074 = vshrl.u32 %v1073, 7
        %v1075 = vsub.s32 0, %v1074
        %v1076 = vrot.slane %v1071, %v1075
        %v1078 = vadd.f32 %v1069, %v1076
        %v1079 = vadd.f32 %v1070, %v1076
        %v1080 = vmax.f32 %v1078, 0.0
        %v1081 = vmax.f32 %v1079, 0.0
        %1082 = vst.msk [vmem:[%s293] sm:$0xff] %vm440, %v1080
        %1083 = vst.msk [vmem:[%s293 + $0x8] sm:$0x7f] %vm799, %v1081
        %p1084 = scmp.lt.s32.totalorder %s19, 1
        %s1085 = scalar_select %p1084, %s19, 1
        %s1086 = smul.addr %s1085, 2
        %s1087 = smul.addr %s1086, 8
        %s1088 = scalar_lea.vmem %s7, %s1087
        // Predicated region
        $region53: #{tpu_custom_call.1} parent=47 // pred_check
          %p1089 = pneg %p189
        $region54: #{tpu_custom_call.1} parent=47 // pred_check_branch
          %1091 = sbr.rel (%p1089) target = $region56
        $region55: #{tpu_custom_call.1} parent=47 // pred_region
          _
        $region56: #{tpu_custom_call.1} parent=47 // pred_fallthru
          _
      $region48: #{tpu_custom_call.1} parent=5 // pred_fallthru
        _
      %p1092 = scmp.le.s32.totalorder 2, %s14
      // Predicated region
      $region57: #{tpu_custom_call.1} parent=5 // pred_check
        %p1093 = pneg %p1092
      $region58: #{tpu_custom_call.1} parent=5 // pred_check_branch
        %1095 = sbr.rel (%p1093) target = $region60
      $region59: #{tpu_custom_call.1} parent=5 // pred_region
        %s1096 = ssub.s32 %s14, 2
        // Predicated region
        $region61: #{tpu_custom_call.1} parent=59 // pred_check
          %p1097 = pneg %p195
        $region62: #{tpu_custom_call.1} parent=59 // pred_check_branch
          %1099 = sbr.rel (%p1097) target = $region64
        $region63: #{tpu_custom_call.1} parent=59 // pred_region
          %p1100 = scmp.lt.s32.totalorder %s20, 1
          %s1101 = scalar_select %p1100, %s20, 1
          %s1102 = smul.addr %s1101, 2
          %s1103 = smul.addr %s1102, 8
          %s1104 = scalar_lea.vmem %s7, %s1103
        $region64: #{tpu_custom_call.1} parent=59 // pred_fallthru
          _
      $region60: #{tpu_custom_call.1} parent=5 // pred_fallthru
        _
    $region6: #{tpu_custom_call.1} parent=1 // loop_footer
      %s18 = sadd.s32 1, %s14
    $region7: #{tpu_custom_call.1} parent=1 // loop_footer_branch
      %13 = sbr.rel target = $region3
    $region8: #{tpu_custom_call.1} parent=1 // loop_exit
      _
    %1105 = vsyncpa [#allocation5], 1
    %s1106 = scalar_lea.sflag [#allocation5], 1
    %1107 = vsyncpa %s1106, 1

</llo_original>
